<compile_context>
chip_gen: v5e
topology: v5e:2x2
jax: 0.10.0
libtpu: 0.0.40
codegen_flags: <defaults>
</compile_context>

<pallas_src>
from functools import partial

import jax
import jax.numpy as jnp
from jax.experimental import pallas as pl
from jax.experimental.pallas import tpu as pltpu

_LANE = 128      # vreg lane width
_SUBLANE = 8     # f32 sublane count


def _round_up(n, m):
    return ((n + m - 1) // m) * m


def _vmem_capacity_bytes():
    """Per-core VMEM capacity; conservative (v7x) fallback if the query fails."""
    try:
        return int(pltpu.get_tpu_info().vmem_capacity_bytes)
    except Exception:
        return 64 * 1024 * 1024


def cwg_kernel(x_ref, w_ref, b_ref, o_ref):
    # x_ref: (TB, C, TS)  w_ref: (C, TS)  b_ref: (1, TS)  o_ref: (TB, TS)
    x = x_ref[...].astype(jnp.float32)          # keep the hot path in f32 (v5e VPU has no bf16)
    w = w_ref[...].astype(jnp.float32)
    b = b_ref[...].astype(jnp.float32)
    # diag(x_b.T @ W): elementwise multiply + reduce over C.  Deliberately not
    # an MXU dot: the op is ~0.5 flop/byte and strictly HBM-bandwidth bound.
    diag = jnp.sum(x * w[None, :, :], axis=1)   # (TB, TS)
    o_ref[...] = jnp.maximum(diag + b, 0.0).astype(o_ref.dtype)


# ----------------------------------------------------------------------------
# Small path: whole problem in one VMEM block, grid=(1,), no pads / slices.
# ----------------------------------------------------------------------------
def _cwg_small(x, weights, bias):
    B, C, S = x.shape
    bias2d = bias.reshape(1, S)
    return pl.pallas_call(
        cwg_kernel,
        out_shape=jax.ShapeDtypeStruct((B, S), x.dtype),
        grid=(1,),
        in_specs=[
            pl.BlockSpec((B, C, S), lambda i: (0, 0, 0)),   # full array: exempt from (8,128)
            pl.BlockSpec((C, S), lambda i: (0, 0)),
            pl.BlockSpec((1, S), lambda i: (0, 0)),
        ],
        out_specs=pl.BlockSpec((B, S), lambda i: (0, 0)),
    )(x, weights, bias2d)


# ----------------------------------------------------------------------------
# Tiled path: only used when the full problem does not comfortably fit VMEM.
# ----------------------------------------------------------------------------
def _choose_tiles(B, C, S, itemsize, budget_bytes):
    """Lane/sublane-dense tiles sized against a generation-aware VMEM budget."""
    c_pad = _round_up(C, _SUBLANE)            # C lands on sublanes and pads to 8/16/...
    b_cap = _round_up(B, _SUBLANE)
    s_lane = _round_up(S, _LANE)

    ts_cands = [t for t in (2048, 1024, 512, 256, 128) if t <= s_lane] or [_LANE]
    # Prefer >=2 blocks on the leading "parallel" size axis so v7x's 2 TCs both
    # get work (e.g. S=900 -> ts=512 -> size grid of 2).
    multi = [t for t in ts_cands if _round_up(S, t) // t >= 2]
    if multi:
        ts_cands = multi

    for ts in ts_cands:
        for tb in (512, 256, 128, 64, 32, 16, 8):
            tb = min(tb, b_cap)
            x_bytes = 2 * tb * c_pad * ts * itemsize   # double-buffered x tile
            w_bytes = c_pad * ts * itemsize            # W resident over the inner batch axis
            b_bytes = _LANE * ts and ts * itemsize     # bias resident
            o_bytes = 2 * tb * ts * itemsize           # double-buffered out tile
            if x_bytes + w_bytes + b_bytes + o_bytes <= budget_bytes:
                return tb, ts
    # Minimal tiles; may still exceed a pathologically small budget (huge C).
    return min(8, b_cap), _LANE


def _cwg_tiled(x, weights, bias, vmem_capacity):
    B, C, S = x.shape
    itemsize = jnp.dtype(x.dtype).itemsize
    budget = int(vmem_capacity * 0.45)    # tile working set (consistent with the limit below)
    limit = int(vmem_capacity * 0.70)     # declared scoped-VMEM limit
    tb, ts = _choose_tiles(B, C, S, itemsize, budget)
    b_pad = _round_up(B, tb)
    s_pad = _round_up(S, ts)

    # Zero padding so every grid step reads/writes a full tile (Pallas does not
    # bounds-check VMEM refs); padded rows/cols are sliced off below.  Only the
    # scale-up path pays for these ops.
    xp = jnp.pad(x, ((0, b_pad - B), (0, 0), (0, s_pad - S)))
    wp = jnp.pad(weights, ((0, 0), (0, s_pad - S)))
    bp = jnp.pad(bias.reshape(1, S), ((0, 0), (0, s_pad - S)))

    # size axis OUTER, batch axis INNER: W/bias block index is constant across
    # the inner loop, so the W tile is DMA'd from HBM only once per size tile.
    grid = (s_pad // ts, b_pad // tb)

    out = pl.pallas_call(
        cwg_kernel,
        out_shape=jax.ShapeDtypeStruct((b_pad, s_pad), x.dtype),
        grid=grid,
        in_specs=[
            pl.BlockSpec((tb, C, ts), lambda s, b: (b, 0, s)),   # x tile
            pl.BlockSpec((C, ts), lambda s, b: (0, s)),          # W: resident over b
            pl.BlockSpec((1, ts), lambda s, b: (0, s)),          # bias: resident over b
        ],
        out_specs=pl.BlockSpec((tb, ts), lambda s, b: (b, s)),   # dense, unmasked stores
        compiler_params=pltpu.CompilerParams(
            dimension_semantics=("parallel", "parallel"),        # megacore / 2-TC sharding
            vmem_limit_bytes=limit,
        ),
    )(xp, wp, bp)
    return out[:B, :S]


@partial(jax.jit, static_argnames=("force_tiled",))
def cwg_forward(x, weights, bias, force_tiled=False):
    """x: (B, C, S), weights: (C, S), bias: (S,)  ->  (B, S)."""
    B, C, S = x.shape
    capacity = _vmem_capacity_bytes()

    # Estimated f32 VMEM footprint of the full-array blocks (with layout padding).
    c_pad = _round_up(C, _SUBLANE)
    s_lane = _round_up(S, _LANE)
    full_bytes = 4 * (B * c_pad * s_lane + c_pad * s_lane + s_lane + B * s_lane)
    fits_small = 3 * full_bytes <= capacity // 2   # 3x headroom for f32 temporaries

    if fits_small and not force_tiled:
        return _cwg_small(x, weights, bias)
    return _cwg_tiled(x, weights, bias, capacity)


def cwg_reference(x, weights, bias):
    # Pure-JAX reference of the PyTorch CWG forward (batch_size > 1 branch).
    return jnp.maximum(
        jnp.sum(x * weights[None, :, :], axis=1) + bias[None, :], 0.0)


if __name__ == "__main__":
    # Shapes the RE_Encoder's CWG actually sees: Filter output is
    # channels = 2*6 = 12, size = 30*30 = 900.  Batch = 2 (small).
    batch, channels, size = 2, 12, 900

    key = jax.random.PRNGKey(0)
    kx, kw = jax.random.split(key)

    # Deterministic init matching CWG.weight_init (xavier_uniform weights, zero bias).
    fan_in, fan_out = size, channels
    bound = (6.0 / (fan_in + fan_out)) ** 0.5
    weights = jax.random.uniform(kw, (channels, size), jnp.float32, -bound, bound)
    bias = jnp.zeros((size,), jnp.float32)

    x = jax.random.normal(kx, (batch, channels, size), jnp.float32)

    ref = cwg_reference(x, weights, bias)

    # Hot path at the real shape: single full-array block, grid=(1,).
    out = jax.block_until_ready(cwg_forward(x, weights, bias))
    assert out.shape == (batch, size)
    assert jnp.allclose(out, ref, atol=1e-5, rtol=1e-5), \
        float(jnp.max(jnp.abs(out - ref)))

    # Also exercise the scale-up (tiled, padded) path once for correctness.
    out_t = jax.block_until_ready(cwg_forward(x, weights, bias, force_tiled=True))
    assert jnp.allclose(out_t, ref, atol=1e-5, rtol=1e-5), \
        float(jnp.max(jnp.abs(out_t - ref)))

    print("KERNEL_OK")
</pallas_src>

<mosaic_0001>
module attributes {stable_mosaic.version = 11 : i64} {
  func.func @cwg_kernel(%arg0: i32, %arg1: memref<2x12x900xf32, #tpu.memory_space<vmem>>, %arg2: memref<12x900xf32, #tpu.memory_space<vmem>>, %arg3: memref<1x900xf32, #tpu.memory_space<vmem>>, %arg4: memref<2x900xf32, #tpu.memory_space<vmem>>) attributes {dimension_semantics = [#tpu.dimension_semantics<arbitrary>], iteration_bounds = array<i64: 1>, scalar_prefetch = 0 : i64, scratch_operands = 0 : i64, tpu.core_type = #tpu.core_type<tc>, window_params = [{pipeline_mode = #tpu.pipeline_mode<synchronous>, transform_indices = @transform_0, window_bounds = array<i64: 2, 12, 900>}, {pipeline_mode = #tpu.pipeline_mode<synchronous>, transform_indices = @transform_1, window_bounds = array<i64: 12, 900>}, {pipeline_mode = #tpu.pipeline_mode<synchronous>, transform_indices = @transform_2, window_bounds = array<i64: 1, 900>}, {pipeline_mode = #tpu.pipeline_mode<synchronous>, transform_indices = @transform_3, window_bounds = array<i64: 2, 900>}]} {
    %c0 = arith.constant 0 : index
    %c0_0 = arith.constant 0 : index
    %c0_1 = arith.constant 0 : index
    %0 = vector.load %arg1[%c0, %c0_0, %c0_1] : memref<2x12x900xf32, #tpu.memory_space<vmem>>, vector<2x12x900xf32>
    %c0_2 = arith.constant 0 : index
    %c0_3 = arith.constant 0 : index
    %1 = vector.load %arg2[%c0_2, %c0_3] : memref<12x900xf32, #tpu.memory_space<vmem>>, vector<12x900xf32>
    %c0_4 = arith.constant 0 : index
    %c0_5 = arith.constant 0 : index
    %2 = vector.load %arg3[%c0_4, %c0_5] : memref<1x900xf32, #tpu.memory_space<vmem>>, vector<1x900xf32>
    %3 = vector.shape_cast %1 : vector<12x900xf32> to vector<1x12x900xf32>
    %4 = vector.broadcast %3 : vector<1x12x900xf32> to vector<2x12x900xf32>
    %5 = arith.mulf %0, %4 : vector<2x12x900xf32>
    %cst = arith.constant dense<0.000000e+00> : vector<2x900xf32>
    %6 = vector.multi_reduction <add>, %5, %cst [1] : vector<2x12x900xf32> to vector<2x900xf32>
    %7 = vector.broadcast %2 : vector<1x900xf32> to vector<2x900xf32>
    %8 = arith.addf %6, %7 : vector<2x900xf32>
    %cst_6 = arith.constant 0.000000e+00 : f32
    %9 = vector.broadcast %cst_6 : f32 to vector<2x900xf32>
    %10 = arith.maximumf %8, %9 : vector<2x900xf32>
    %c0_7 = arith.constant 0 : index
    %c0_8 = arith.constant 0 : index
    %11 = vector.load %arg4[%c0_7, %c0_8] : memref<2x900xf32, #tpu.memory_space<vmem>>, vector<2x900xf32>
    tpu.vector_store %arg4[%c0_7, %c0_8], %10 {strides = array<i32>} : memref<2x900xf32, #tpu.memory_space<vmem>>, vector<2x900xf32>,
    return
  }
  func.func @transform_0(%arg0: i32) -> (i32, i32, i32) {
    %c0_i32 = arith.constant 0 : i32
    %c0_i32_0 = arith.constant 0 : i32
    %c0_i32_1 = arith.constant 0 : i32
    %c0_i32_2 = arith.constant 0 : i32
    return %c0_i32, %c0_i32_0, %c0_i32_1 : i32, i32, i32
  }
  func.func @transform_1(%arg0: i32) -> (i32, i32) {
    %c0_i32 = arith.constant 0 : i32
    %c0_i32_0 = arith.constant 0 : i32
    %c0_i32_1 = arith.constant 0 : i32
    return %c0_i32, %c0_i32_0 : i32, i32
  }
  func.func @transform_2(%arg0: i32) -> (i32, i32) {
    %c0_i32 = arith.constant 0 : i32
    %c0_i32_0 = arith.constant 0 : i32
    %c0_i32_1 = arith.constant 0 : i32
    return %c0_i32, %c0_i32_0 : i32, i32
  }
  func.func @transform_3(%arg0: i32) -> (i32, i32) {
    %c0_i32 = arith.constant 0 : i32
    %c0_i32_0 = arith.constant 0 : i32
    %c0_i32_1 = arith.constant 0 : i32
    return %c0_i32, %c0_i32_0 : i32, i32
  }
}

</mosaic_0001>

<llo_original>
// kernel: cwg_forward.1
$region0: #{cwg_forward.1}
  #allocation0 [shape = 'u32[]', space=smem, size = 0x4, offset = 0x4, fixed_abs, tag = 'smem constant byte address 0x4 - core index']
  #allocation1 [shape = 'u32[72,128]{1,0:T(1,128)}', space=vmem, size = 0x9000, scoped, tag = 'internal scratch']
  %s0 = inlined_call_operand.vmem [shape: f32[2,12,900], index: 0, kind: input, shape index: {}]
  %s1 = inlined_call_operand.vmem [shape: f32[12,900], index: 1, kind: input, shape index: {}]
  %s2 = inlined_call_operand.vmem [shape: f32[1,900], index: 2, kind: input, shape index: {}]
  %s3 = inlined_call_operand.hbm [shape: f32[2,900], index: 3, kind: output, shape index: {}]
  %s4 = sld [smem:[#allocation0]]
  $region22: #{cwg_forward.1} parent=0
    _
  %s6 = ssub.s32 1, %s4
  %s7 = scalar_select 0, %s6, %s4
  $region1: #{cwg_forward.1} parent=0
    #allocation2 [shape = 'u8[8192]{0}', space=vmem, size = 0x2000, scoped, tag = 'output window, operand 0, single buffered']
    #allocation3 [shape = 's32[1]{0}', space=sflag, size = 0x4, scoped, tag = 'scoped memory for cwg_forward.1']
    %8 = vsyncpa [#allocation3], 0
    // Predicated region
    $region2: #{cwg_forward.1} parent=1 // pred_check
      _
    $region3: #{cwg_forward.1} parent=1 // pred_check_branch
      %10 = sbr.rel (0) target = $region5
    $region4: #{cwg_forward.1} parent=1 // pred_region
      _
    $region5: #{cwg_forward.1} parent=1 // pred_fallthru
      _
    // Predicated region
    $region6: #{cwg_forward.1} parent=1 // pred_check
      _
    $region7: #{cwg_forward.1} parent=1 // pred_check_branch
      %12 = sbr.rel (0) target = $region9
    $region8: #{cwg_forward.1} parent=1 // pred_region
      _
    $region9: #{cwg_forward.1} parent=1 // pred_fallthru
      _
    // Predicated region
    $region10: #{cwg_forward.1} parent=1 // pred_check
      _
    $region11: #{cwg_forward.1} parent=1 // pred_check_branch
      %14 = sbr.rel (0) target = $region13
    $region12: #{cwg_forward.1} parent=1 // pred_region
      _
    $region13: #{cwg_forward.1} parent=1 // pred_fallthru
      _
    %v15 = vld [vmem:[%s0] sm:$0xff]
    %v16 = vld [vmem:[%s0 + $0x8] sm:$0xff]
    %v17 = vld [vmem:[%s0 + $0x10] sm:$0xff]
    %v18 = vld [vmem:[%s0 + $0x18] sm:$0xff]
    %v19 = vld [vmem:[%s0 + $0x20] sm:$0xff]
    %v20 = vld [vmem:[%s0 + $0x28] sm:$0xff]
    %v21 = vld [vmem:[%s0 + $0x30] sm:$0xff]
    %v22 = vld [vmem:[%s0 + $0x38] sm:$0xff]
    %v23 = vld [vmem:[%s0 + $0x40] sm:$0xf]
    %v24 = vld [vmem:[%s0 + $0x48] sm:$0xf]
    %v25 = vld [vmem:[%s0 + $0x50] sm:$0xf]
    %v26 = vld [vmem:[%s0 + $0x58] sm:$0xf]
    %v27 = vld [vmem:[%s0 + $0x60] sm:$0xf]
    %v28 = vld [vmem:[%s0 + $0x68] sm:$0xf]
    %v29 = vld [vmem:[%s0 + $0x70] sm:$0xf]
    %v30 = vld [vmem:[%s0 + $0x78] sm:$0xf]
    %v31 = vld [vmem:[%s0 + $0x80] sm:$0xff]
    %v32 = vld [vmem:[%s0 + $0x88] sm:$0xff]
    %v33 = vld [vmem:[%s0 + $0x90] sm:$0xff]
    %v34 = vld [vmem:[%s0 + $0x98] sm:$0xff]
    %v35 = vld [vmem:[%s0 + $0xa0] sm:$0xff]
    %v36 = vld [vmem:[%s0 + $0xa8] sm:$0xff]
    %v37 = vld [vmem:[%s0 + $0xb0] sm:$0xff]
    %v38 = vld [vmem:[%s0 + $0xb8] sm:$0xff]
    %v39 = vld [vmem:[%s0 + $0xc0] sm:$0xf]
    %v40 = vld [vmem:[%s0 + $0xc8] sm:$0xf]
    %v41 = vld [vmem:[%s0 + $0xd0] sm:$0xf]
    %v42 = vld [vmem:[%s0 + $0xd8] sm:$0xf]
    %v43 = vld [vmem:[%s0 + $0xe0] sm:$0xf]
    %v44 = vld [vmem:[%s0 + $0xe8] sm:$0xf]
    %v45 = vld [vmem:[%s0 + $0xf0] sm:$0xf]
    %v46 = vld [vmem:[%s0 + $0xf8] sm:$0xf]
    %v47 = vld [vmem:[%s1] sm:$0xff]
    %v48 = vld [vmem:[%s1 + $0x8] sm:$0xff]
    %v49 = vld [vmem:[%s1 + $0x10] sm:$0xff]
    %v50 = vld [vmem:[%s1 + $0x18] sm:$0xff]
    %v51 = vld [vmem:[%s1 + $0x20] sm:$0xff]
    %v52 = vld [vmem:[%s1 + $0x28] sm:$0xff]
    %v53 = vld [vmem:[%s1 + $0x30] sm:$0xff]
    %v54 = vld [vmem:[%s1 + $0x38] sm:$0xff]
    %v55 = vld [vmem:[%s1 + $0x40] sm:$0xf]
    %v56 = vld [vmem:[%s1 + $0x48] sm:$0xf]
    %v57 = vld [vmem:[%s1 + $0x50] sm:$0xf]
    %v58 = vld [vmem:[%s1 + $0x58] sm:$0xf]
    %v59 = vld [vmem:[%s1 + $0x60] sm:$0xf]
    %v60 = vld [vmem:[%s1 + $0x68] sm:$0xf]
    %v61 = vld [vmem:[%s1 + $0x70] sm:$0xf]
    %v62 = vld [vmem:[%s1 + $0x78] sm:$0xf]
    %v63 = vld [vmem:[%s2] sm:$0xff]
    %v64 = vmul.f32 %v15, %v47
    %v65 = vmul.f32 %v16, %v48
    %v66 = vmul.f32 %v17, %v49
    %v67 = vmul.f32 %v18, %v50
    %v68 = vmul.f32 %v19, %v51
    %v69 = vmul.f32 %v20, %v52
    %v70 = vmul.f32 %v21, %v53
    %v71 = vmul.f32 %v22, %v54
    %v72 = vmul.f32 %v23, %v55
    %v73 = vmul.f32 %v24, %v56
    %v74 = vmul.f32 %v25, %v57
    %v75 = vmul.f32 %v26, %v58
    %v76 = vmul.f32 %v27, %v59
    %v77 = vmul.f32 %v28, %v60
    %v78 = vmul.f32 %v29, %v61
    %v79 = vmul.f32 %v30, %v62
    %v80 = vmul.f32 %v31, %v47
    %v81 = vmul.f32 %v32, %v48
    %v82 = vmul.f32 %v33, %v49
    %v83 = vmul.f32 %v34, %v50
    %v84 = vmul.f32 %v35, %v51
    %v85 = vmul.f32 %v36, %v52
    %v86 = vmul.f32 %v37, %v53
    %v87 = vmul.f32 %v38, %v54
    %v88 = vmul.f32 %v39, %v55
    %v89 = vmul.f32 %v40, %v56
    %v90 = vmul.f32 %v41, %v57
    %v91 = vmul.f32 %v42, %v58
    %v92 = vmul.f32 %v43, %v59
    %v93 = vmul.f32 %v44, %v60
    %v94 = vmul.f32 %v45, %v61
    %v95 = vmul.f32 %v46, %v62
    %vm96 = vcmask 1043456
    %v97 = vsel %vm96, %v72, 0.0
    %v98 = vadd.f32 %v64, %v97
    %v99 = vrot.slane %v98, 4
    %v100 = vadd.f32 %v98, %v99
    %v101 = vrot.slane %v100, 2
    %v102 = vadd.f32 %v100, %v101
    %v103 = vrot.slane %v102, 1
    %v104 = vadd.f32 %v102, %v103
    %v105 = vsel %vm96, %v73, 0.0
    %v106 = vadd.f32 %v65, %v105
    %v107 = vrot.slane %v106, 4
    %v108 = vadd.f32 %v106, %v107
    %v109 = vrot.slane %v108, 2
    %v110 = vadd.f32 %v108, %v109
    %v111 = vrot.slane %v110, 1
    %v112 = vadd.f32 %v110, %v111
    %v113 = vsel %vm96, %v74, 0.0
    %v114 = vadd.f32 %v66, %v113
    %v115 = vrot.slane %v114, 4
    %v116 = vadd.f32 %v114, %v115
    %v117 = vrot.slane %v116, 2
    %v118 = vadd.f32 %v116, %v117
    %v119 = vrot.slane %v118, 1
    %v120 = vadd.f32 %v118, %v119
    %v121 = vsel %vm96, %v75, 0.0
    %v122 = vadd.f32 %v67, %v121
    %v123 = vrot.slane %v122, 4
    %v124 = vadd.f32 %v122, %v123
    %v125 = vrot.slane %v124, 2
    %v126 = vadd.f32 %v124, %v125
    %v127 = vrot.slane %v126, 1
    %v128 = vadd.f32 %v126, %v127
    %v129 = vsel %vm96, %v76, 0.0
    %v130 = vadd.f32 %v68, %v129
    %v131 = vrot.slane %v130, 4
    %v132 = vadd.f32 %v130, %v131
    %v133 = vrot.slane %v132, 2
    %v134 = vadd.f32 %v132, %v133
    %v135 = vrot.slane %v134, 1
    %v136 = vadd.f32 %v134, %v135
    %v137 = vsel %vm96, %v77, 0.0
    %v138 = vadd.f32 %v69, %v137
    %v139 = vrot.slane %v138, 4
    %v140 = vadd.f32 %v138, %v139
    %v141 = vrot.slane %v140, 2
    %v142 = vadd.f32 %v140, %v141
    %v143 = vrot.slane %v142, 1
    %v144 = vadd.f32 %v142, %v143
    %v145 = vsel %vm96, %v78, 0.0
    %v146 = vadd.f32 %v70, %v145
    %v147 = vrot.slane %v146, 4
    %v148 = vadd.f32 %v146, %v147
    %v149 = vrot.slane %v148, 2
    %v150 = vadd.f32 %v148, %v149
    %v151 = vrot.slane %v150, 1
    %v152 = vadd.f32 %v150, %v151
    %vm153 = vcmask 31744
    %v154 = vsel %vm153, %v71, 0.0
    %vm155 = vcmask 27648
    %v156 = vsel %vm155, %v79, 0.0
    %v157 = vadd.f32 %v154, %v156
    %v158 = vrot.slane %v157, 4
    %v159 = vadd.f32 %v157, %v158
    %v160 = vrot.slane %v159, 2
    %v161 = vadd.f32 %v159, %v160
    %v162 = vrot.slane %v161, 1
    %v163 = vadd.f32 %v161, %v162
    %v164 = vsel %vm96, %v88, 0.0
    %v165 = vadd.f32 %v80, %v164
    %v166 = vrot.slane %v165, 4
    %v167 = vadd.f32 %v165, %v166
    %v168 = vrot.slane %v167, 2
    %v169 = vadd.f32 %v167, %v168
    %v170 = vrot.slane %v169, 1
    %v171 = vadd.f32 %v169, %v170
    %v172 = vsel %vm96, %v89, 0.0
    %v173 = vadd.f32 %v81, %v172
    %v174 = vrot.slane %v173, 4
    %v175 = vadd.f32 %v173, %v174
    %v176 = vrot.slane %v175, 2
    %v177 = vadd.f32 %v175, %v176
    %v178 = vrot.slane %v177, 1
    %v179 = vadd.f32 %v177, %v178
    %v180 = vsel %vm96, %v90, 0.0
    %v181 = vadd.f32 %v82, %v180
    %v182 = vrot.slane %v181, 4
    %v183 = vadd.f32 %v181, %v182
    %v184 = vrot.slane %v183, 2
    %v185 = vadd.f32 %v183, %v184
    %v186 = vrot.slane %v185, 1
    %v187 = vadd.f32 %v185, %v186
    %v188 = vsel %vm96, %v91, 0.0
    %v189 = vadd.f32 %v83, %v188
    %v190 = vrot.slane %v189, 4
    %v191 = vadd.f32 %v189, %v190
    %v192 = vrot.slane %v191, 2
    %v193 = vadd.f32 %v191, %v192
    %v194 = vrot.slane %v193, 1
    %v195 = vadd.f32 %v193, %v194
    %v196 = vsel %vm96, %v92, 0.0
    %v197 = vadd.f32 %v84, %v196
    %v198 = vrot.slane %v197, 4
    %v199 = vadd.f32 %v197, %v198
    %v200 = vrot.slane %v199, 2
    %v201 = vadd.f32 %v199, %v200
    %v202 = vrot.slane %v201, 1
    %v203 = vadd.f32 %v201, %v202
    %v204 = vsel %vm96, %v93, 0.0
    %v205 = vadd.f32 %v85, %v204
    %v206 = vrot.slane %v205, 4
    %v207 = vadd.f32 %v205, %v206
    %v208 = vrot.slane %v207, 2
    %v209 = vadd.f32 %v207, %v208
    %v210 = vrot.slane %v209, 1
    %v211 = vadd.f32 %v209, %v210
    %v212 = vsel %vm96, %v94, 0.0
    %v213 = vadd.f32 %v86, %v212
    %v214 = vrot.slane %v213, 4
    %v215 = vadd.f32 %v213, %v214
    %v216 = vrot.slane %v215, 2
    %v217 = vadd.f32 %v215, %v216
    %v218 = vrot.slane %v217, 1
    %v219 = vadd.f32 %v217, %v218
    %v220 = vsel %vm153, %v87, 0.0
    %v221 = vsel %vm155, %v95, 0.0
    %v222 = vadd.f32 %v220, %v221
    %v223 = vrot.slane %v222, 4
    %v224 = vadd.f32 %v222, %v223
    %v225 = vrot.slane %v224, 2
    %v226 = vadd.f32 %v224, %v225
    %v227 = vrot.slane %v226, 1
    %v228 = vadd.f32 %v226, %v227
    %v230 = vperm.slane %v63, 0
    %v231 = vperm.slane %v63, 1
    %v232 = vperm.slane %v63, 2
    %v233 = vperm.slane %v63, 3
    %v234 = vperm.slane %v63, 4
    %v235 = vperm.slane %v63, 5
    %v236 = vperm.slane %v63, 6
    %v237 = vperm.slane %v63, 7
    %v246 = vadd.f32 %v104, %v230
    %v247 = vadd.f32 %v112, %v231
    %v248 = vadd.f32 %v120, %v232
    %v249 = vadd.f32 %v128, %v233
    %v250 = vadd.f32 %v136, %v234
    %v251 = vadd.f32 %v144, %v235
    %v252 = vadd.f32 %v152, %v236
    %v253 = vadd.f32 %v163, %v237
    %v254 = vadd.f32 %v171, %v230
    %v255 = vadd.f32 %v179, %v231
    %v256 = vadd.f32 %v187, %v232
    %v257 = vadd.f32 %v195, %v233
    %v258 = vadd.f32 %v203, %v234
    %v259 = vadd.f32 %v211, %v235
    %v260 = vadd.f32 %v219, %v236
    %v261 = vadd.f32 %v228, %v237
    %v262 = vmax.f32 %v246, 0.0
    %v263 = vmax.f32 %v247, 0.0
    %v264 = vmax.f32 %v248, 0.0
    %v265 = vmax.f32 %v249, 0.0
    %v266 = vmax.f32 %v250, 0.0
    %v267 = vmax.f32 %v251, 0.0
    %v268 = vmax.f32 %v252, 0.0
    %v269 = vmax.f32 %v253, 0.0
    %v270 = vmax.f32 %v254, 0.0
    %v271 = vmax.f32 %v255, 0.0
    %v272 = vmax.f32 %v256, 0.0
    %v273 = vmax.f32 %v257, 0.0
    %v274 = vmax.f32 %v258, 0.0
    %v275 = vmax.f32 %v259, 0.0
    %v276 = vmax.f32 %v260, 0.0
    %v277 = vmax.f32 %v261, 0.0
    %v294 = vrot.slane %v263, 6
    %v295 = vrot.slane %v264, 4
    %v296 = vrot.slane %v265, 2
    %v297 = vrot.slane %v267, 6
    %v298 = vrot.slane %v268, 4
    %v299 = vrot.slane %v269, 2
    %v300 = vrot.slane %v271, 6
    %v301 = vrot.slane %v272, 4
    %v302 = vrot.slane %v273, 2
    %v303 = vrot.slane %v275, 6
    %v304 = vrot.slane %v276, 4
    %v305 = vrot.slane %v277, 2
    %vm306 = vcmask 1041408
    %v307 = vsel %vm306, %v262, %v294
    %vm308 = vcmask 1045508
    %v309 = vsel %vm308, %v295, %v296
    %v310 = vsel %vm96, %v307, %v309
    %v311 = vsel %vm306, %v266, %v297
    %v312 = vsel %vm308, %v298, %v299
    %v313 = vsel %vm96, %v311, %v312
    %v314 = vsel %vm306, %v270, %v300
    %v315 = vsel %vm308, %v301, %v302
    %v316 = vsel %vm96, %v314, %v315
    %v317 = vsel %vm306, %v274, %v303
    %v318 = vsel %vm308, %v304, %v305
    %v319 = vsel %vm96, %v317, %v318
    %vm320 = vcmask 1044484
    %v321 = vsel %vm320, %v310, %v310
    %vm322 = vcmask 1046534
    %v323 = vsel %vm322, %v310, %v321
    %v324 = vrot.slane %v316, 7
    %vm325 = vcmask 1041409
    %v326 = vsel %vm325, %v324, %v323
    %vm327 = vcmask 1043459
    %v328 = vsel %vm327, %v324, %v326
    %vm329 = vcmask 1045509
    %v330 = vsel %vm329, %v324, %v328
    %vm331 = vcmask 1047559
    %v332 = vsel %vm331, %v324, %v330
    %v333 = vsel %vm320, %v313, %v313
    %v334 = vsel %vm322, %v313, %v333
    %v335 = vrot.slane %v319, 7
    %v336 = vsel %vm325, %v335, %v334
    %v337 = vsel %vm327, %v335, %v336
    %v338 = vsel %vm329, %v335, %v337
    %v339 = vsel %vm331, %v335, %v338
    %342 = vst [vmem:[#allocation2] sm:$0xff] %v332
    %vm343 = vcmask 1043458
    %vm344 = vmor %vm343, %vm306
    %vm345 = vmor %vm308, %vm344
    %vm346 = vcmask 31750
    %vm347 = vmor %vm346, %vm345
    %348 = vst.msk [vmem:[#allocation2 + $0x8] sm:$0xff] %vm347, %v339
    // Predicated region
    $region14: #{cwg_forward.1} parent=1 // pred_check
      _
    $region15: #{cwg_forward.1} parent=1 // pred_check_branch
      %350 = sbr.rel (0) target = $region17
    $region16: #{cwg_forward.1} parent=1 // pred_region
      %352 = vsyncadd [#allocation3], 0
      %s354 = sshll.u32 [#allocation2], 4
      %s355 = int_to_ptr.vmem [resolvable:$true] %s354
      %s356 = sshll.u32 %s3, 4
      %s357 = int_to_ptr.hbm [resolvable:$true] %s356
      %359 = dma.vmem_to_hbm [thread:$0]  %s355, 256, %s357, [#allocation3]
    $region17: #{cwg_forward.1} parent=1 // pred_fallthru
      _
    // Predicated region
    $region18: #{cwg_forward.1} parent=1 // pred_check
      _
    $region19: #{cwg_forward.1} parent=1 // pred_check_branch
      %361 = sbr.rel (0) target = $region21
    $region20: #{cwg_forward.1} parent=1 // pred_region
      %363 = dma.done [#allocation3], 256
    $region21: #{cwg_forward.1} parent=1 // pred_fallthru
      _
    %364 = vsyncpa [#allocation3], 1

</llo_original>
